<compile_context>
chip_gen: v7x
topology: tpu7x:2x2x1
jax: 0.10.0
libtpu: 0.0.40
codegen_flags: <defaults>
</compile_context>

<pallas_src>
import functools

import jax
import jax.numpy as jnp
from jax.experimental import pallas as pl
from jax.experimental.pallas import tpu as pltpu


_NEG_BIG = float(jnp.finfo(jnp.float32).min)


def _round_up(x: int, m: int) -> int:
    return ((x + m - 1) // m) * m


def _choose_batch_tile(B: int) -> int:
    """Batch tile: sublane-aligned and large (per-grid-step overhead dominates
    this memory-bound kernel), but >= 2 grid steps for big batches so the
    'parallel' axis can shard across v7x's two TensorCores."""
    Bp8 = _round_up(B, 8)
    if Bp8 <= 256:
        return Bp8                      # single small tile
    tb = min(1024, max(256, Bp8 // 2))  # big tiles, >= 2 steps
    return max(256, (tb // 256) * 256)  # 256-multiple


def _ppo_kernel(s_ref, w1_ref, b1_ref, w2_ref, b2_ref, out_ref, *, action_dim):
    # ---- fused layer 1: [actor_h | critic_h] in one MXU pass ----
    h = jnp.dot(s_ref[...], w1_ref[...], preferred_element_type=jnp.float32)
    h = jnp.maximum(h + b1_ref[...], 0.0)                       # (TB, 2H)

    # ---- fused layer 2 (block-diagonal): [logits | value | pad] ----
    z = jnp.dot(h, w2_ref[...], preferred_element_type=jnp.float32)
    z = z + b2_ref[...]                                         # (TB, Np)

    # Softmax over logit lanes.  Pad lanes (> action_dim) already carry a huge
    # negative bias baked into b2, so only the value lane needs masking here.
    col = jax.lax.broadcasted_iota(jnp.int32, z.shape, 1)
    is_value = col == action_dim
    masked = jnp.where(is_value, _NEG_BIG, z)
    m = jnp.max(masked, axis=-1, keepdims=True)
    e = jnp.exp(masked - m)                                     # value/pad -> 0
    denom = jnp.sum(e, axis=-1, keepdims=True)
    # EUP approx reciprocal + one Newton step (~2^-22 rel err).
    r = pl.reciprocal(denom, approx=True)
    r = r * (2.0 - denom * r)
    probs = e * r

    # Output slab: [probs (A lanes) | value (1 lane) | zeros (probs==0 there)].
    out_ref[...] = jnp.where(is_value, z, probs)


def ppo_actor_critic(state, packed, action_dim):
    """state: (B, state_dim) f32.  packed: dict from pack_params()."""
    B, S = state.shape
    S_w, H2 = packed["w1"].shape
    assert S_w == S, "packed W1 row dim must equal state_dim"
    Np = packed["w2"].shape[1]

    TB = _choose_batch_tile(B)
    Bp = _round_up(B, TB)

    # Feed state straight through when tile-aligned; only a ragged tail forces
    # a rows-only pad copy.  Feature dim stays unpadded.
    if Bp == B:
        s = state
    else:
        s = jnp.zeros((Bp, S), state.dtype).at[:B].set(state)

    kernel = functools.partial(_ppo_kernel, action_dim=action_dim)
    resident = pl.Buffered(1)   # constant index_map -> no double-buffering

    flops = 2 * Bp * (S * H2 + H2 * Np)
    bytes_accessed = 4 * (Bp * S + S * H2 + H2 + H2 * Np + Np + Bp * Np)
    transcendentals = Bp * (Np + 1)   # exp + approx reciprocal

    out = pl.pallas_call(
        kernel,
        out_shape=jax.ShapeDtypeStruct((Bp, Np), jnp.float32),
        grid_spec=pltpu.PrefetchScalarGridSpec(
            num_scalar_prefetch=0,
            grid=(Bp // TB,),
            in_specs=[
                pl.BlockSpec((TB, S), lambda i: (i, 0)),                  # state tile
                pl.BlockSpec((S, H2), lambda i: (0, 0), pipeline_mode=resident),
                pl.BlockSpec((1, H2), lambda i: (0, 0), pipeline_mode=resident),
                pl.BlockSpec((H2, Np), lambda i: (0, 0), pipeline_mode=resident),
                pl.BlockSpec((1, Np), lambda i: (0, 0), pipeline_mode=resident),
            ],
            out_specs=pl.BlockSpec((TB, Np), lambda i: (i, 0)),
        ),
        compiler_params=pltpu.CompilerParams(
            dimension_semantics=("parallel",)),
        cost_estimate=pl.CostEstimate(
            flops=flops,
            transcendentals=transcendentals,
            bytes_accessed=bytes_accessed),
    )(s, packed["w1"], packed["b1"], packed["w2"], packed["b2"])

    probs = out[:B, :action_dim]
    value = out[:B, action_dim:action_dim + 1]
    return probs, value


def init_params(key, state_dim, action_dim, hidden_dim):
    """nn.Linear-style init (uniform +-1/sqrt(fan_in)).
    Weights stored (in, out); biases stored (1, out)."""
    ks = jax.random.split(key, 8)

    def lin(kw, kb, fan_in, fan_out):
        bound = 1.0 / jnp.sqrt(jnp.float32(fan_in))
        w = jax.random.uniform(kw, (fan_in, fan_out), jnp.float32, -bound, bound)
        b = jax.random.uniform(kb, (1, fan_out), jnp.float32, -bound, bound)
        return w, b

    aw1, ab1 = lin(ks[0], ks[1], state_dim, hidden_dim)
    aw2, ab2 = lin(ks[2], ks[3], hidden_dim, action_dim)
    cw1, cb1 = lin(ks[4], ks[5], state_dim, hidden_dim)
    cw2, cb2 = lin(ks[6], ks[7], hidden_dim, 1)
    return dict(aw1=aw1, ab1=ab1, aw2=aw2, ab2=ab2,
                cw1=cw1, cb1=cb1, cw2=cw2, cb2=cb2)


def pack_params(p, state_dim, action_dim, hidden_dim):
    """Pack actor+critic into two lane-dense matmuls.

    W1p: (state_dim, 2H)  cols [0:H)=actor L1, [H:2H)=critic L1 (NO feature pad)
    W2p: (2H, Np)         block-diagonal: rows[0:H) x cols[0:A)=actor L2,
                          rows[H:2H) x col A = critic L2.  Np = round_up(A+1,128).
    b2p pad lanes (> A) are set to a huge negative so the kernel softmax only
    needs to mask the value lane.
    """
    H2 = _round_up(2 * hidden_dim, 128)
    Np = _round_up(action_dim + 1, 128)
    H, A = hidden_dim, action_dim

    w1 = jnp.zeros((state_dim, H2), jnp.float32)
    w1 = w1.at[:, :H].set(p["aw1"])
    w1 = w1.at[:, H:2 * H].set(p["cw1"])
    b1 = jnp.zeros((1, H2), jnp.float32)
    b1 = b1.at[:, :H].set(p["ab1"])
    b1 = b1.at[:, H:2 * H].set(p["cb1"])

    w2 = jnp.zeros((H2, Np), jnp.float32)
    w2 = w2.at[:H, :A].set(p["aw2"])
    w2 = w2.at[H:2 * H, A:A + 1].set(p["cw2"])
    b2 = jnp.full((1, Np), _NEG_BIG, jnp.float32)   # pad-lane kill baked in
    b2 = b2.at[:, :A].set(p["ab2"])
    b2 = b2.at[:, A:A + 1].set(p["cb2"])

    return dict(w1=w1, b1=b1, w2=w2, b2=b2)


def _reference(state, p):
    h_a = jnp.maximum(state @ p["aw1"] + p["ab1"], 0.0)
    logits = h_a @ p["aw2"] + p["ab2"]
    probs = jax.nn.softmax(logits, axis=-1)
    h_c = jnp.maximum(state @ p["cw1"] + p["cb1"], 0.0)
    value = h_c @ p["cw2"] + p["cb2"]
    return probs, value


if __name__ == "__main__":
    B, STATE_DIM, ACTION_DIM, HIDDEN_DIM = 8, 16, 8, 128  # module default hidden

    key = jax.random.PRNGKey(0)
    k_state, k_params, k_state2 = jax.random.split(key, 3)
    state = jax.random.normal(k_state, (B, STATE_DIM), jnp.float32)
    params = init_params(k_params, STATE_DIM, ACTION_DIM, HIDDEN_DIM)
    packed = pack_params(params, STATE_DIM, ACTION_DIM, HIDDEN_DIM)

    probs, value = jax.block_until_ready(
        ppo_actor_critic(state, packed, ACTION_DIM))

    # sanity-check against a pure-JAX reference
    ref_probs, ref_value = _reference(state, params)
    assert probs.shape == (B, ACTION_DIM) and value.shape == (B, 1)
    assert jnp.allclose(probs, ref_probs, atol=1e-5, rtol=1e-5)
    assert jnp.allclose(value, ref_value, atol=1e-5, rtol=1e-5)
    assert jnp.allclose(jnp.sum(probs, axis=-1), 1.0, atol=1e-5)

    # exercise the ragged-batch (row-pad) path too
    B2 = 20
    state2 = jax.random.normal(k_state2, (B2, STATE_DIM), jnp.float32)
    probs2, value2 = jax.block_until_ready(
        ppo_actor_critic(state2, packed, ACTION_DIM))
    ref_probs2, ref_value2 = _reference(state2, params)
    assert probs2.shape == (B2, ACTION_DIM) and value2.shape == (B2, 1)
    assert jnp.allclose(probs2, ref_probs2, atol=1e-5, rtol=1e-5)
    assert jnp.allclose(value2, ref_value2, atol=1e-5, rtol=1e-5)

    print("KERNEL_OK")
</pallas_src>

<mosaic_0001>
module attributes {stable_mosaic.version = 11 : i64} {
  func.func @_ppo_kernel(%arg0: i32, %arg1: memref<8x16xf32, #tpu.memory_space<vmem>>, %arg2: memref<16x256xf32, #tpu.memory_space<vmem>>, %arg3: memref<1x256xf32, #tpu.memory_space<vmem>>, %arg4: memref<256x128xf32, #tpu.memory_space<vmem>>, %arg5: memref<1x128xf32, #tpu.memory_space<vmem>>, %arg6: memref<8x128xf32, #tpu.memory_space<vmem>>) attributes {dimension_semantics = [#tpu.dimension_semantics<parallel>], iteration_bounds = array<i64: 1>, scalar_prefetch = 0 : i64, scratch_operands = 0 : i64, tpu.core_type = #tpu.core_type<tc>, window_params = [{transform_indices = @transform_0, window_bounds = array<i64: 8, 16>}, {pipeline_mode = #tpu.pipeline_mode<synchronous>, transform_indices = @transform_1, window_bounds = array<i64: 16, 256>}, {pipeline_mode = #tpu.pipeline_mode<synchronous>, transform_indices = @transform_2, window_bounds = array<i64: 1, 256>}, {pipeline_mode = #tpu.pipeline_mode<synchronous>, transform_indices = @transform_3, window_bounds = array<i64: 256, 128>}, {pipeline_mode = #tpu.pipeline_mode<synchronous>, transform_indices = @transform_4, window_bounds = array<i64: 1, 128>}, {transform_indices = @transform_5, window_bounds = array<i64: 8, 128>}]} {
    %c0 = arith.constant 0 : index
    %c0_0 = arith.constant 0 : index
    %0 = vector.load %arg1[%c0, %c0_0] : memref<8x16xf32, #tpu.memory_space<vmem>>, vector<8x16xf32>
    %c0_1 = arith.constant 0 : index
    %c0_2 = arith.constant 0 : index
    %1 = vector.load %arg2[%c0_1, %c0_2] : memref<16x256xf32, #tpu.memory_space<vmem>>, vector<16x256xf32>
    %cst = arith.constant dense<0.000000e+00> : vector<8x256xf32>
    %2 = tpu.matmul %0, %1, %cst {dimension_numbers = #tpu.dot_dimension_numbers<[1], [0], [0], [1], [0, 0, 1, 1], [], []>} : vector<8x16xf32>, vector<16x256xf32>, vector<8x256xf32> -> vector<8x256xf32>
    %c0_3 = arith.constant 0 : index
    %c0_4 = arith.constant 0 : index
    %3 = vector.load %arg3[%c0_3, %c0_4] : memref<1x256xf32, #tpu.memory_space<vmem>>, vector<1x256xf32>
    %4 = vector.broadcast %3 : vector<1x256xf32> to vector<8x256xf32>
    %5 = arith.addf %2, %4 : vector<8x256xf32>
    %cst_5 = arith.constant 0.000000e+00 : f32
    %6 = vector.broadcast %cst_5 : f32 to vector<8x256xf32>
    %7 = arith.maximumf %5, %6 : vector<8x256xf32>
    %c0_6 = arith.constant 0 : index
    %c0_7 = arith.constant 0 : index
    %8 = vector.load %arg4[%c0_6, %c0_7] : memref<256x128xf32, #tpu.memory_space<vmem>>, vector<256x128xf32>
    %cst_8 = arith.constant dense<0.000000e+00> : vector<8x128xf32>
    %9 = tpu.matmul %7, %8, %cst_8 {dimension_numbers = #tpu.dot_dimension_numbers<[1], [0], [0], [1], [0, 0, 1, 1], [], []>} : vector<8x256xf32>, vector<256x128xf32>, vector<8x128xf32> -> vector<8x128xf32>
    %c0_9 = arith.constant 0 : index
    %c0_10 = arith.constant 0 : index
    %10 = vector.load %arg5[%c0_9, %c0_10] : memref<1x128xf32, #tpu.memory_space<vmem>>, vector<1x128xf32>
    %11 = vector.broadcast %10 : vector<1x128xf32> to vector<8x128xf32>
    %12 = arith.addf %9, %11 : vector<8x128xf32>
    %13 = tpu.iota {dimensions = array<i32: 1>} : vector<8x128xi32>
    %c8_i32 = arith.constant 8 : i32
    %14 = vector.broadcast %c8_i32 : i32 to vector<8x128xi32>
    %15 = arith.cmpi eq, %13, %14 : vector<8x128xi32>
    %cst_11 = arith.constant -3.40282347E+38 : f32
    %16 = vector.broadcast %cst_11 : f32 to vector<8x128xf32>
    %17 = arith.select %15, %16, %12 : vector<8x128xi1>, vector<8x128xf32>
    %cst_12 = arith.constant dense<0xFF800000> : vector<8xf32>
    %18 = vector.multi_reduction <maximumf>, %17, %cst_12 [1] : vector<8x128xf32> to vector<8xf32>
    %19 = vector.shape_cast %18 : vector<8xf32> to vector<8x1xf32>
    %20 = vector.broadcast %19 : vector<8x1xf32> to vector<8x128xf32>
    %21 = arith.subf %17, %20 : vector<8x128xf32>
    %22 = math.exp %21 : vector<8x128xf32>
    %cst_13 = arith.constant dense<0.000000e+00> : vector<8xf32>
    %23 = vector.multi_reduction <add>, %22, %cst_13 [1] : vector<8x128xf32> to vector<8xf32>
    %24 = vector.shape_cast %23 : vector<8xf32> to vector<8x1xf32>
    %25 = tpu.reciprocal %24 {approx = true} : vector<8x1xf32> -> vector<8x1xf32>
    %26 = arith.mulf %24, %25 : vector<8x1xf32>
    %cst_14 = arith.constant 2.000000e+00 : f32
    %27 = vector.broadcast %cst_14 : f32 to vector<8x1xf32>
    %28 = arith.subf %27, %26 : vector<8x1xf32>
    %29 = arith.mulf %25, %28 : vector<8x1xf32>
    %30 = vector.broadcast %29 : vector<8x1xf32> to vector<8x128xf32>
    %31 = arith.mulf %22, %30 : vector<8x128xf32>
    %32 = arith.select %15, %12, %31 : vector<8x128xi1>, vector<8x128xf32>
    %c0_15 = arith.constant 0 : index
    %c0_16 = arith.constant 0 : index
    %33 = vector.load %arg6[%c0_15, %c0_16] : memref<8x128xf32, #tpu.memory_space<vmem>>, vector<8x128xf32>
    tpu.vector_store %arg6[%c0_15, %c0_16], %32 {strides = array<i32>} : memref<8x128xf32, #tpu.memory_space<vmem>>, vector<8x128xf32>,
    return
  }
  func.func @transform_0(%arg0: i32) -> (i32, i32) {
    %c0_i32 = arith.constant 0 : i32
    %c0_i32_0 = arith.constant 0 : i32
    return %arg0, %c0_i32 : i32, i32
  }
  func.func @transform_1(%arg0: i32) -> (i32, i32) {
    %c0_i32 = arith.constant 0 : i32
    %c0_i32_0 = arith.constant 0 : i32
    %c0_i32_1 = arith.constant 0 : i32
    return %c0_i32, %c0_i32_0 : i32, i32
  }
  func.func @transform_2(%arg0: i32) -> (i32, i32) {
    %c0_i32 = arith.constant 0 : i32
    %c0_i32_0 = arith.constant 0 : i32
    %c0_i32_1 = arith.constant 0 : i32
    return %c0_i32, %c0_i32_0 : i32, i32
  }
  func.func @transform_3(%arg0: i32) -> (i32, i32) {
    %c0_i32 = arith.constant 0 : i32
    %c0_i32_0 = arith.constant 0 : i32
    %c0_i32_1 = arith.constant 0 : i32
    return %c0_i32, %c0_i32_0 : i32, i32
  }
  func.func @transform_4(%arg0: i32) -> (i32, i32) {
    %c0_i32 = arith.constant 0 : i32
    %c0_i32_0 = arith.constant 0 : i32
    %c0_i32_1 = arith.constant 0 : i32
    return %c0_i32, %c0_i32_0 : i32, i32
  }
  func.func @transform_5(%arg0: i32) -> (i32, i32) {
    %c0_i32 = arith.constant 0 : i32
    %c0_i32_0 = arith.constant 0 : i32
    return %arg0, %c0_i32 : i32, i32
  }
}

</mosaic_0001>

<llo_original>
// kernel: tpu_custom_call.1
$region0: #{tpu_custom_call.1}
  #allocation0 [shape = 'u32[]', space=smem, size = 0x4, offset = 0x4, fixed_abs, tag = 'smem constant byte address 0x4 - core index']
  #allocation1 [shape = 'u32[144,128]{1,0:T(1,128)}', space=vmem, size = 0x12000, scoped, tag = 'internal scratch']
  %s0 = inlined_call_operand.hbm [shape: f32[8,16], index: 0, kind: input, shape index: {}]
  %s1 = inlined_call_operand.hbm [shape: f32[16,256], index: 1, kind: input, shape index: {}]
  %s2 = inlined_call_operand.vmem [shape: f32[1,256], index: 2, kind: input, shape index: {}]
  %s3 = inlined_call_operand.hbm [shape: f32[256,128], index: 3, kind: input, shape index: {}]
  %s4 = inlined_call_operand.vmem [shape: f32[1,128], index: 4, kind: input, shape index: {}]
  %s5 = inlined_call_operand.hbm [shape: f32[8,128], index: 5, kind: output, shape index: {}]
  %s6 = sld [smem:[#allocation0]]
  $region42: #{tpu_custom_call.1} parent=0
    _
  %s8 = ssub.s32 1, %s6
  %s9 = scalar_select 0, %s8, %s6
  $region1: #{tpu_custom_call.1} parent=0
    #allocation2 [shape = 'u8[4096]{0}', space=vmem, size = 0x1000, scoped, tag = 'input window, operand 0, single buffered']
    #allocation3 [shape = 's32[1]{0}', space=sflag, size = 0x4, scoped, tag = 'scoped memory for tpu_custom_call.1']
    #allocation4 [shape = 's32[1]{0}', space=sflag, size = 0x4, scoped, tag = 'scoped memory for tpu_custom_call.1']
    #allocation5 [shape = 'u8[16384]{0}', space=vmem, size = 0x4000, scoped, tag = 'input window, operand 1, single buffered']
    #allocation6 [shape = 's32[1]{0}', space=sflag, size = 0x4, scoped, tag = 'scoped memory for tpu_custom_call.1']
    #allocation7 [shape = 'u8[131072]{0}', space=vmem, size = 0x20000, scoped, tag = 'input window, operand 3, single buffered']
    #allocation8 [shape = 'u8[4096]{0}', space=vmem, size = 0x1000, scoped, tag = 'output window, operand 0, single buffered']
    %10 = vsyncpa [#allocation3], 0
    %11 = vsyncpa [#allocation6], 0
    %12 = vsyncpa [#allocation4], 0
    // Predicated region
    $region2: #{tpu_custom_call.1} parent=1 // pred_check
      _
    $region3: #{tpu_custom_call.1} parent=1 // pred_check_branch
      %14 = sbr.rel (0) target = $region5
    $region4: #{tpu_custom_call.1} parent=1 // pred_region
      %s16 = ssub.s32 128, 128
      %17 = vsyncadd [#allocation3], %s16
      %s19 = sshll.u32 [#allocation2], 4
      %s20 = int_to_ptr.vmem [resolvable:$true] %s19
      %22 = dma.hbm_to_vmem [thread:$0]  %s0, 128, %s20, [#allocation3]
    $region5: #{tpu_custom_call.1} parent=1 // pred_fallthru
      _
    // Predicated region
    $region6: #{tpu_custom_call.1} parent=1 // pred_check
      _
    $region7: #{tpu_custom_call.1} parent=1 // pred_check_branch
      %24 = sbr.rel (0) target = $region9
    $region8: #{tpu_custom_call.1} parent=1 // pred_region
      %s26 = ssub.s32 512, 512
      %27 = vsyncadd [#allocation6], %s26
      %s28 = sshll.u32 [#allocation5], 4
      %s29 = int_to_ptr.vmem [resolvable:$true] %s28
      %34 = dma.hbm_to_vmem [thread:$0]  %s1, 512, %s29, [#allocation6], 256, 256, 16
    $region9: #{tpu_custom_call.1} parent=1 // pred_fallthru
      _
    // Predicated region
    $region10: #{tpu_custom_call.1} parent=1 // pred_check
      _
    $region11: #{tpu_custom_call.1} parent=1 // pred_check_branch
      %36 = sbr.rel (0) target = $region13
    $region12: #{tpu_custom_call.1} parent=1 // pred_region
      _
    $region13: #{tpu_custom_call.1} parent=1 // pred_fallthru
      _
    // Predicated region
    $region14: #{tpu_custom_call.1} parent=1 // pred_check
      _
    $region15: #{tpu_custom_call.1} parent=1 // pred_check_branch
      %38 = sbr.rel (0) target = $region17
    $region16: #{tpu_custom_call.1} parent=1 // pred_region
      %s40 = ssub.s32 4096, 4096
      %41 = vsyncadd [#allocation6], %s40
      %s42 = sshll.u32 [#allocation7], 4
      %s43 = int_to_ptr.vmem [resolvable:$true] %s42
      %48 = dma.hbm_to_vmem [thread:$0]  %s3, 4096, %s43, [#allocation6], 128, 128, 8
    $region17: #{tpu_custom_call.1} parent=1 // pred_fallthru
      _
    // Predicated region
    $region18: #{tpu_custom_call.1} parent=1 // pred_check
      _
    $region19: #{tpu_custom_call.1} parent=1 // pred_check_branch
      %50 = sbr.rel (0) target = $region21
    $region20: #{tpu_custom_call.1} parent=1 // pred_region
      _
    $region21: #{tpu_custom_call.1} parent=1 // pred_fallthru
      _
    // Predicated region
    $region22: #{tpu_custom_call.1} parent=1 // pred_check
      _
    $region23: #{tpu_custom_call.1} parent=1 // pred_check_branch
      %52 = sbr.rel (0) target = $region25
    $region24: #{tpu_custom_call.1} parent=1 // pred_region
      %53 = dma.done [#allocation3], 128
    $region25: #{tpu_custom_call.1} parent=1 // pred_fallthru
      _
    // Predicated region
    $region26: #{tpu_custom_call.1} parent=1 // pred_check
      _
    $region27: #{tpu_custom_call.1} parent=1 // pred_check_branch
      %55 = sbr.rel (0) target = $region29
    $region28: #{tpu_custom_call.1} parent=1 // pred_region
      %56 = dma.done [#allocation6], 512
    $region29: #{tpu_custom_call.1} parent=1 // pred_fallthru
      _
    // Predicated region
    $region30: #{tpu_custom_call.1} parent=1 // pred_check
      _
    $region31: #{tpu_custom_call.1} parent=1 // pred_check_branch
      %58 = sbr.rel (0) target = $region33
    $region32: #{tpu_custom_call.1} parent=1 // pred_region
      %59 = dma.done [#allocation6], 4096
    $region33: #{tpu_custom_call.1} parent=1 // pred_fallthru
      _
    %v60 = vld [vmem:[#allocation2] sm:$0xff]
    %v61 = vld [vmem:[#allocation5] sm:$0xff]
    %v62 = vld [vmem:[#allocation5 + $0x8] sm:$0xff]
    %v63 = vld [vmem:[#allocation5 + $0x10] sm:$0xff]
    %v64 = vld [vmem:[#allocation5 + $0x18] sm:$0xff]
    %v65 = vld [vmem:[%s2] sm:$0x3]
    %v67 = vlaneseq
    %v68 = vshrl.u32 %v67, 7
    %v69 = vsub.s32 0, %v68
    %v70 = vrot.slane %v65, %v69
    %v71 = vlaneseq
    %v72 = vshrl.u32 %v71, 7
    %v73 = vsub.s32 1, %v72
    %v74 = vrot.slane %v65, %v73
    %vm77 = vcmask 130048
    %v79 = vsel %vm77, %v60, 0
    %81 = vmatprep.subr.mxu0 %v62
    %82 = vmatpush1.msra.mxu0 %v61
    %83 = vmatprep.subr.mxu0 %v64
    %84 = vmatpush1.msra.mxu0 %v63
    %85 = vmatprep.subr.mxu0 0.0
    %86 = vmatpush1.msra.mxu0 0.0
    %87 = vmatprep.subr.mxu0 0.0
    %88 = vmatpush1.msra.mxu0 0.0
    %89 = vmatprep.subr.mxu0 0.0
    %90 = vmatpush1.msra.mxu0 0.0
    %91 = vmatprep.subr.mxu0 0.0
    %92 = vmatpush1.msra.mxu0 0.0
    %93 = vmatprep.subr.mxu0 0.0
    %94 = vmatpush1.msra.mxu0 0.0
    %95 = vmatprep.subr.mxu0 0.0
    %96 = vmatpush1.msra.mxu0 0.0
    %97 = vmatprep.subr.mxu0 0.0
    %98 = vmatpush1.msra.mxu0 0.0
    %99 = vmatprep.subr.mxu0 0.0
    %100 = vmatpush1.msra.mxu0 0.0
    %101 = vmatprep.subr.mxu0 0.0
    %102 = vmatpush1.msra.mxu0 0.0
    %103 = vmatprep.subr.mxu0 0.0
    %104 = vmatpush1.msra.mxu0 0.0
    %105 = vmatprep.subr.mxu0 0.0
    %106 = vmatpush1.msra.mxu0 0.0
    %107 = vmatprep.subr.mxu0 0.0
    %108 = vmatpush1.msra.mxu0 0.0
    %109 = vmatprep.subr.mxu0 0.0
    %110 = vmatpush1.msra.mxu0 0.0
    %111 = vmatprep.subr.mxu0 0.0
    %112 = vmatpush1.msra.mxu0 0.0
    %113 = vmatprep.subr.mxu0 0.0
    %114 = vmatpush1.msra.mxu0 0.0
    %115 = vmatprep.subr.mxu0 0.0
    %116 = vmatpush1.msra.mxu0 0.0
    %117 = vmatprep.subr.mxu0 0.0
    %118 = vmatpush1.msra.mxu0 0.0
    %119 = vmatprep.subr.mxu0 0.0
    %120 = vmatpush1.msra.mxu0 0.0
    %121 = vmatprep.subr.mxu0 0.0
    %122 = vmatpush1.msra.mxu0 0.0
    %123 = vmatprep.subr.mxu0 0.0
    %124 = vmatpush1.msra.mxu0 0.0
    %125 = vmatprep.subr.mxu0 0.0
    %126 = vmatpush1.msra.mxu0 0.0
    %127 = vmatprep.subr.mxu0 0.0
    %128 = vmatpush1.msra.mxu0 0.0
    %129 = vmatprep.subr.mxu0 0.0
    %130 = vmatpush1.msra.mxu0 0.0
    %131 = vmatprep.subr.mxu0 0.0
    %132 = vmatpush1.msra.mxu0 0.0
    %133 = vmatprep.subr.mxu0 0.0
    %134 = vmatpush1.msra.mxu0 0.0
    %135 = vmatprep.subr.mxu0 0.0
    %136 = vmatpush1.msra.mxu0 0.0
    %137 = vmatprep.subr.mxu0 0.0
    %138 = vmatpush1.msra.mxu0 0.0
    %139 = vmatprep.subr.mxu0 0.0
    %140 = vmatpush1.msra.mxu0 0.0
    %141 = vmatprep.subr.mxu0 0.0
    %142 = vmatpush1.msra.mxu0 0.0
    %143 = vmatprep.subr.mxu0 0.0
    %144 = vmatpush1.msra.mxu0 0.0
    %145 = vmatprep.mubr.f32.mxu0 0.0
    %146 = vmatmul.mubr.f32.gmra.mrb[0].mxu0 %v79
    %v147 = vpop.f32.mrb[0].mxu0
    %v148 = vadd.f32 %v70, %v147
    %v149 = vpop.f32.mrb[0].mxu0
    %v150 = vadd.f32 %v74, %v149
    %151 = vdwg.mxu0
    %v152 = vmax.f32 %v148, 0.0
    %v153 = vmax.f32 %v150, 0.0
    %v154 = vld [vmem:[#allocation7] sm:$0xff]
    %v155 = vld [vmem:[#allocation7 + $0x8] sm:$0xff]
    %v156 = vld [vmem:[#allocation7 + $0x10] sm:$0xff]
    %v157 = vld [vmem:[#allocation7 + $0x18] sm:$0xff]
    %v158 = vld [vmem:[#allocation7 + $0x20] sm:$0xff]
    %v159 = vld [vmem:[#allocation7 + $0x28] sm:$0xff]
    %v160 = vld [vmem:[#allocation7 + $0x30] sm:$0xff]
    %v161 = vld [vmem:[#allocation7 + $0x38] sm:$0xff]
    %v162 = vld [vmem:[#allocation7 + $0x40] sm:$0xff]
    %v163 = vld [vmem:[#allocation7 + $0x48] sm:$0xff]
    %v164 = vld [vmem:[#allocation7 + $0x50] sm:$0xff]
    %v165 = vld [vmem:[#allocation7 + $0x58] sm:$0xff]
    %v166 = vld [vmem:[#allocation7 + $0x60] sm:$0xff]
    %v167 = vld [vmem:[#allocation7 + $0x68] sm:$0xff]
    %v168 = vld [vmem:[#allocation7 + $0x70] sm:$0xff]
    %v169 = vld [vmem:[#allocation7 + $0x78] sm:$0xff]
    %v170 = vld [vmem:[#allocation7 + $0x80] sm:$0xff]
    %v171 = vld [vmem:[#allocation7 + $0x88] sm:$0xff]
    %v172 = vld [vmem:[#allocation7 + $0x90] sm:$0xff]
    %v173 = vld [vmem:[#allocation7 + $0x98] sm:$0xff]
    %v174 = vld [vmem:[#allocation7 + $0xa0] sm:$0xff]
    %v175 = vld [vmem:[#allocation7 + $0xa8] sm:$0xff]
    %v176 = vld [vmem:[#allocation7 + $0xb0] sm:$0xff]
    %v177 = vld [vmem:[#allocation7 + $0xb8] sm:$0xff]
    %v178 = vld [vmem:[#allocation7 + $0xc0] sm:$0xff]
    %v179 = vld [vmem:[#allocation7 + $0xc8] sm:$0xff]
    %v180 = vld [vmem:[#allocation7 + $0xd0] sm:$0xff]
    %v181 = vld [vmem:[#allocation7 + $0xd8] sm:$0xff]
    %v182 = vld [vmem:[#allocation7 + $0xe0] sm:$0xff]
    %v183 = vld [vmem:[#allocation7 + $0xe8] sm:$0xff]
    %v184 = vld [vmem:[#allocation7 + $0xf0] sm:$0xff]
    %v185 = vld [vmem:[#allocation7 + $0xf8] sm:$0xff]
    %v186 = vld [vmem:[%s4] sm:$0x1]
    %v188 = vlaneseq
    %v189 = vshrl.u32 %v188, 7
    %v190 = vsub.s32 0, %v189
    %v191 = vrot.slane %v186, %v190
    %193 = vmatprep.subr.mxu0 0.0
    %194 = vmatpush1.msra.mxu0 %v154
    %195 = vmatprep.subr.mxu0 0.0
    %196 = vmatpush1.msra.mxu0 %v155
    %197 = vmatprep.subr.mxu0 0.0
    %198 = vmatpush1.msra.mxu0 %v156
    %199 = vmatprep.subr.mxu0 0.0
    %200 = vmatpush1.msra.mxu0 %v157
    %201 = vmatprep.subr.mxu0 0.0
    %202 = vmatpush1.msra.mxu0 %v158
    %203 = vmatprep.subr.mxu0 0.0
    %204 = vmatpush1.msra.mxu0 %v159
    %205 = vmatprep.subr.mxu0 0.0
    %206 = vmatpush1.msra.mxu0 %v160
    %207 = vmatprep.subr.mxu0 0.0
    %208 = vmatpush1.msra.mxu0 %v161
    %209 = vmatprep.subr.mxu0 0.0
    %210 = vmatpush1.msra.mxu0 %v162
    %211 = vmatprep.subr.mxu0 0.0
    %212 = vmatpush1.msra.mxu0 %v163
    %213 = vmatprep.subr.mxu0 0.0
    %214 = vmatpush1.msra.mxu0 %v164
    %215 = vmatprep.subr.mxu0 0.0
    %216 = vmatpush1.msra.mxu0 %v165
    %217 = vmatprep.subr.mxu0 0.0
    %218 = vmatpush1.msra.mxu0 %v166
    %219 = vmatprep.subr.mxu0 0.0
    %220 = vmatpush1.msra.mxu0 %v167
    %221 = vmatprep.subr.mxu0 0.0
    %222 = vmatpush1.msra.mxu0 %v168
    %223 = vmatprep.subr.mxu0 0.0
    %224 = vmatpush1.msra.mxu0 %v169
    %225 = vmatprep.subr.mxu0 0.0
    %226 = vmatpush1.msra.mxu0 %v170
    %227 = vmatprep.subr.mxu0 0.0
    %228 = vmatpush1.msra.mxu0 %v171
    %229 = vmatprep.subr.mxu0 0.0
    %230 = vmatpush1.msra.mxu0 %v172
    %231 = vmatprep.subr.mxu0 0.0
    %232 = vmatpush1.msra.mxu0 %v173
    %233 = vmatprep.subr.mxu0 0.0
    %234 = vmatpush1.msra.mxu0 %v174
    %235 = vmatprep.subr.mxu0 0.0
    %236 = vmatpush1.msra.mxu0 %v175
    %237 = vmatprep.subr.mxu0 0.0
    %238 = vmatpush1.msra.mxu0 %v176
    %239 = vmatprep.subr.mxu0 0.0
    %240 = vmatpush1.msra.mxu0 %v177
    %241 = vmatprep.subr.mxu0 0.0
    %242 = vmatpush1.msra.mxu0 %v178
    %243 = vmatprep.subr.mxu0 0.0
    %244 = vmatpush1.msra.mxu0 %v179
    %245 = vmatprep.subr.mxu0 0.0
    %246 = vmatpush1.msra.mxu0 %v180
    %247 = vmatprep.subr.mxu0 0.0
    %248 = vmatpush1.msra.mxu0 %v181
    %249 = vmatprep.subr.mxu0 0.0
    %250 = vmatpush1.msra.mxu0 %v182
    %251 = vmatprep.subr.mxu0 0.0
    %252 = vmatpush1.msra.mxu0 %v183
    %253 = vmatprep.subr.mxu0 0.0
    %254 = vmatpush1.msra.mxu0 %v184
    %255 = vmatprep.subr.mxu0 0.0
    %256 = vmatpush1.msra.mxu0 %v185
    %257 = vmatprep.mubr.f32.mxu0 %v153
    %258 = vmatmul.mubr.f32.gmra.mrb[0].mxu0 %v152
    %v259 = vpop.f32.mrb[0].mxu0
    %v260 = vadd.f32 %v191, %v259
    %v261 = vpop.f32.mrb[0].mxu0
    %262 = vdwg.mxu0
    %v263 = vlaneseq
    %v264 = vand.u32 %v263, 127
    %vm265 = vcmp.eq.s32.totalorder %v264, 8
    %v266 = vsel %vm265, -3.4028235e+38, %v260
    %267 = vmax.xlane.f32.xlu0 %v266
    %v268 = vpop.xlane.xlu0 %267
    %v269 = vsub.f32 %v266, %v268
    %v270 = vmul.f32 %v269, 1.442695
    %v271 = vpow.pop %v270
    %272 = vadd.xlane.f32.xlu0 %v271
    %v273 = vpop.xlane.xlu0 %272
    %v274 = vrcp.pop %v273
    %v275 = vmul.f32 %v273, %v274
    %v276 = vsub.f32 2.0, %v275
    %v277 = vmul.f32 %v274, %v276
    %v278 = vmul.f32 %v271, %v277
    %v279 = vsel %vm265, %v260, %v278
    %280 = vst [vmem:[#allocation8] sm:$0xff] %v279
    // Predicated region
    $region34: #{tpu_custom_call.1} parent=1 // pred_check
      _
    $region35: #{tpu_custom_call.1} parent=1 // pred_check_branch
      %282 = sbr.rel (0) target = $region37
    $region36: #{tpu_custom_call.1} parent=1 // pred_region
      %s284 = ssub.s32 128, 128
      %285 = vsyncadd [#allocation4], %s284
      %s287 = sshll.u32 [#allocation8], 4
      %s288 = int_to_ptr.vmem [resolvable:$true] %s287
      %290 = dma.vmem_to_hbm [thread:$0]  %s288, 128, %s5, [#allocation4]
    $region37: #{tpu_custom_call.1} parent=1 // pred_fallthru
      _
    // Predicated region
    $region38: #{tpu_custom_call.1} parent=1 // pred_check
      _
    $region39: #{tpu_custom_call.1} parent=1 // pred_check_branch
      %292 = sbr.rel (0) target = $region41
    $region40: #{tpu_custom_call.1} parent=1 // pred_region
      %293 = dma.done [#allocation4], 128
    $region41: #{tpu_custom_call.1} parent=1 // pred_fallthru
      _
    %294 = vsyncpa [#allocation3], 1
    %295 = vsyncpa [#allocation6], 1
    %296 = vsyncpa [#allocation4], 1

</llo_original>
